<compile_context>
chip_gen: v7x
topology: tpu7x:2x2x1
jax: 0.10.0
libtpu: 0.0.40
codegen_flags: <defaults>
</compile_context>

<pallas_src>
import functools

import jax
import jax.numpy as jnp
from jax import lax
from jax.experimental import pallas as pl
from jax.experimental.pallas import tpu as pltpu


def _conv_relu_kernel(x_ref, w_ref, b_ref, o_ref, *, kh, kw, img_w, length):
    # x_ref: (Cin, L)   lane-dense input, L = N*H*W, flat index = n*H*W + y*W + x
    # w_ref: (Cout, K)  flattened weights, contraction order (dy, dx, ci)
    # b_ref: (Cout, 1)
    # o_ref: (Cout, L)  lane-dense output slab (wrapper slices the valid columns)
    x = x_ref[...]

    # Roll-based im2col: tap (dy, dx) is the input rotated left by s = dy*W + dx
    # lanes, so tap[:, p] = x[:, p + s] for every output column the wrapper
    # keeps. Rotations run on the XLU; no slice/reshape/concat lane relayout.
    taps = []
    for dy in range(kh):
        for dx in range(kw):
            s = dy * img_w + dx
            taps.append(x if s == 0 else pltpu.roll(x, length - s, axis=1))
    patches = jnp.concatenate(taps, axis=0)          # (KH*KW*Cin, L)

    # One MXU GEMM, f32 accumulate, bias lane-broadcast, ReLU.
    acc = jnp.dot(w_ref[...], patches, preferred_element_type=jnp.float32)
    acc = acc + b_ref[...]
    o_ref[...] = jnp.maximum(acc, 0.0).astype(o_ref.dtype)


@jax.jit
def weighted_sum_forward(x_nchw, weight_oihw, bias):
    """Conv2d(custom_weights) + ReLU, matching the PyTorch WeightedSum module.

    x_nchw:      (N, Cin, H, W)      float32
    weight_oihw: (Cout, Cin, KH, KW) float32
    bias:        (Cout,)             float32
    returns:     (N, Cout, Ho, Wo)   float32, Ho = H-KH+1, Wo = W-KW+1
    """
    N, Cin, H, W = x_nchw.shape
    Cout, _, KH, KW = weight_oihw.shape
    Ho, Wo = H - KH + 1, W - KW + 1
    K = KH * KW * Cin
    L = N * H * W

    # Layout plumbing only (tiny, outside the kernel):
    #   input   -> (Cin, N*H*W) lane-dense, lane index = n*H*W + y*W + x
    #   weights -> (Cout, K)    contraction order (dy, dx, ci)
    #   bias    -> (Cout, 1)
    x_flat = jnp.transpose(x_nchw, (1, 0, 2, 3)).reshape(Cin, L)
    w_flat = jnp.transpose(weight_oihw, (0, 2, 3, 1)).reshape(Cout, K)
    b2d = bias.reshape(Cout, 1)

    kernel = functools.partial(_conv_relu_kernel, kh=KH, kw=KW, img_w=W, length=L)

    out_full = pl.pallas_call(
        kernel,
        out_shape=jax.ShapeDtypeStruct((Cout, L), x_nchw.dtype),
        in_specs=[
            pl.BlockSpec((Cin, L), lambda: (0, 0)),
            pl.BlockSpec((Cout, K), lambda: (0, 0)),
            pl.BlockSpec((Cout, 1), lambda: (0, 0)),
        ],
        out_specs=pl.BlockSpec((Cout, L), lambda: (0, 0)),
        cost_estimate=pl.CostEstimate(
            flops=2 * Cout * K * L,
            transcendentals=0,
            bytes_accessed=4 * (Cin * L + Cout * K + Cout + Cout * L)),
    )(x_flat, w_flat, b2d)

    # Keep only columns with y < Ho and x < Wo; tiny reshape/transpose to NCHW.
    out = out_full.reshape(Cout, N, H, W)[:, :, :Ho, :Wo]
    return jnp.transpose(out, (1, 0, 2, 3))


def _reference(x_nchw, weight_oihw, bias):
    out = lax.conv_general_dilated(
        x_nchw, weight_oihw,
        window_strides=(1, 1), padding="VALID",
        dimension_numbers=("NCHW", "OIHW", "NCHW"))
    out = out + bias.reshape(1, -1, 1, 1)
    return jnp.maximum(out, 0.0)


if __name__ == "__main__":
    # Small shapes consistent with the module: batch=2, in=4, out=8, 16x16, k=3
    N, Cin, Cout, H, W, K = 2, 4, 8, 16, 16, 3

    key = jax.random.PRNGKey(0)
    kx, kwt, kb = jax.random.split(key, 3)

    x = jax.random.normal(kx, (N, Cin, H, W), dtype=jnp.float32)
    # "custom_weights" analogue: deterministic in-script init, OIHW like nn.Conv2d
    custom_weights = jax.random.normal(kwt, (Cout, Cin, K, K), dtype=jnp.float32) * 0.1
    bias = jax.random.normal(kb, (Cout,), dtype=jnp.float32) * 0.05

    out = jax.block_until_ready(weighted_sum_forward(x, custom_weights, bias))
    ref = jax.block_until_ready(_reference(x, custom_weights, bias))

    assert out.shape == (N, Cout, H - K + 1, W - K + 1)
    assert jnp.allclose(out, ref, atol=1e-4, rtol=1e-4), "mismatch vs reference conv"

    print("KERNEL_OK")
</pallas_src>

<mosaic_0001>
module attributes {stable_mosaic.version = 11 : i64} {
  func.func @_conv_relu_kernel(%arg0: memref<4x512xf32, #tpu.memory_space<vmem>>, %arg1: memref<8x36xf32, #tpu.memory_space<vmem>>, %arg2: memref<8x1xf32, #tpu.memory_space<vmem>>, %arg3: memref<8x512xf32, #tpu.memory_space<vmem>>) attributes {dimension_semantics = [], scalar_prefetch = 0 : i64, scratch_operands = 0 : i64, tpu.core_type = #tpu.core_type<tc>} {
    %c0 = arith.constant 0 : index
    %c0_0 = arith.constant 0 : index
    %0 = vector.load %arg0[%c0, %c0_0] : memref<4x512xf32, #tpu.memory_space<vmem>>, vector<4x512xf32>
    %c511_i32 = arith.constant 511 : i32
    %1 = tpu.dynamic_rotate %0 by %c511_i32 dim 1 : vector<4x512xf32>, i32 -> vector<4x512xf32>
    %c510_i32 = arith.constant 510 : i32
    %2 = tpu.dynamic_rotate %0 by %c510_i32 dim 1 : vector<4x512xf32>, i32 -> vector<4x512xf32>
    %c496_i32 = arith.constant 496 : i32
    %3 = tpu.dynamic_rotate %0 by %c496_i32 dim 1 : vector<4x512xf32>, i32 -> vector<4x512xf32>
    %c495_i32 = arith.constant 495 : i32
    %4 = tpu.dynamic_rotate %0 by %c495_i32 dim 1 : vector<4x512xf32>, i32 -> vector<4x512xf32>
    %c494_i32 = arith.constant 494 : i32
    %5 = tpu.dynamic_rotate %0 by %c494_i32 dim 1 : vector<4x512xf32>, i32 -> vector<4x512xf32>
    %c480_i32 = arith.constant 480 : i32
    %6 = tpu.dynamic_rotate %0 by %c480_i32 dim 1 : vector<4x512xf32>, i32 -> vector<4x512xf32>
    %c479_i32 = arith.constant 479 : i32
    %7 = tpu.dynamic_rotate %0 by %c479_i32 dim 1 : vector<4x512xf32>, i32 -> vector<4x512xf32>
    %c478_i32 = arith.constant 478 : i32
    %8 = tpu.dynamic_rotate %0 by %c478_i32 dim 1 : vector<4x512xf32>, i32 -> vector<4x512xf32>
    %9 = tpu.concatenate %0, %1, %2, %3, %4, %5, %6, %7, %8 in 0 : vector<4x512xf32>, vector<4x512xf32>, vector<4x512xf32>, vector<4x512xf32>, vector<4x512xf32>, vector<4x512xf32>, vector<4x512xf32>, vector<4x512xf32>, vector<4x512xf32> -> vector<36x512xf32>
    %c0_1 = arith.constant 0 : index
    %c0_2 = arith.constant 0 : index
    %10 = vector.load %arg1[%c0_1, %c0_2] : memref<8x36xf32, #tpu.memory_space<vmem>>, vector<8x36xf32>
    %cst = arith.constant dense<0.000000e+00> : vector<8x512xf32>
    %11 = tpu.matmul %10, %9, %cst {dimension_numbers = #tpu.dot_dimension_numbers<[1], [0], [0], [1], [0, 0, 1, 1], [], []>} : vector<8x36xf32>, vector<36x512xf32>, vector<8x512xf32> -> vector<8x512xf32>
    %c0_3 = arith.constant 0 : index
    %c0_4 = arith.constant 0 : index
    %12 = vector.load %arg2[%c0_3, %c0_4] : memref<8x1xf32, #tpu.memory_space<vmem>>, vector<8x1xf32>
    %13 = vector.broadcast %12 : vector<8x1xf32> to vector<8x512xf32>
    %14 = arith.addf %11, %13 : vector<8x512xf32>
    %cst_5 = arith.constant 0.000000e+00 : f32
    %15 = vector.broadcast %cst_5 : f32 to vector<8x512xf32>
    %16 = arith.maximumf %14, %15 : vector<8x512xf32>
    %c0_6 = arith.constant 0 : index
    %c0_7 = arith.constant 0 : index
    %17 = vector.load %arg3[%c0_6, %c0_7] : memref<8x512xf32, #tpu.memory_space<vmem>>, vector<8x512xf32>
    tpu.vector_store %arg3[%c0_6, %c0_7], %16 {strides = array<i32>} : memref<8x512xf32, #tpu.memory_space<vmem>>, vector<8x512xf32>,
    return
  }
}

</mosaic_0001>

<llo_original>
// kernel: weighted_sum_forward.1
$region0: #{weighted_sum_forward.1}
  #allocation0 [shape = 'u32[]', space=smem, size = 0x4, offset = 0x4, fixed_abs, tag = 'smem constant byte address 0x4 - core index']
  #allocation1 [shape = 'u32[144,128]{1,0:T(1,128)}', space=vmem, size = 0x12000, scoped, tag = 'internal scratch']
  %s0 = inlined_call_operand.vmem [shape: f32[4,512], index: 0, kind: input, shape index: {}]
  %s1 = inlined_call_operand.vmem [shape: f32[8,36], index: 1, kind: input, shape index: {}]
  %s2 = inlined_call_operand.vmem [shape: f32[8,1], index: 2, kind: input, shape index: {}]
  %s3 = inlined_call_operand.vmem [shape: f32[8,512], index: 3, kind: output, shape index: {}]
  %s4 = sld [smem:[#allocation0]]
  $region22: #{weighted_sum_forward.1} parent=0
    _
  %s6 = ssub.s32 1, %s4
  %s7 = scalar_select 0, %s6, %s4
  // Predicated region
  $region2: #{weighted_sum_forward.1} parent=0 // pred_check
    _
  $region3: #{weighted_sum_forward.1} parent=0 // pred_check_branch
    %9 = sbr.rel (0) target = $region5
  $region4: #{weighted_sum_forward.1} parent=0 // pred_region
    _
  $region5: #{weighted_sum_forward.1} parent=0 // pred_fallthru
    _
  // Predicated region
  $region6: #{weighted_sum_forward.1} parent=0 // pred_check
    _
  $region7: #{weighted_sum_forward.1} parent=0 // pred_check_branch
    %11 = sbr.rel (0) target = $region9
  $region8: #{weighted_sum_forward.1} parent=0 // pred_region
    _
  $region9: #{weighted_sum_forward.1} parent=0 // pred_fallthru
    _
  // Predicated region
  $region10: #{weighted_sum_forward.1} parent=0 // pred_check
    _
  $region11: #{weighted_sum_forward.1} parent=0 // pred_check_branch
    %13 = sbr.rel (0) target = $region13
  $region12: #{weighted_sum_forward.1} parent=0 // pred_region
    _
  $region13: #{weighted_sum_forward.1} parent=0 // pred_fallthru
    _
  %v14 = vld [vmem:[%s0] sm:$0xff]
  %v15 = vld [vmem:[%s0 + $0x8] sm:$0xff]
  %v18 = vcombine.high %v14, %v14
  %v19 = vcombine.high %v15, %v15
  %22 = vrot.lane.b32.xlu0 %v14, 127
  %v23 = vpop.permute.xlu0 %22
  %24 = vrot.lane.b32.xlu0 %v18, 127
  %v25 = vpop.permute.xlu0 %24
  %26 = vrot.lane.b32.xlu0 %v15, 127
  %v27 = vpop.permute.xlu0 %26
  %28 = vrot.lane.b32.xlu0 %v19, 127
  %v29 = vpop.permute.xlu0 %28
  %v30 = vlaneseq
  %v31 = vand.u32 %v30, 127
  %vm32 = vcmp.lt.s32.totalorder %v31, 127
  %v33 = vsel %vm32, %v27, %v29
  %v34 = vsel %vm32, %v25, %v27
  %v35 = vsel %vm32, %v23, %v25
  %v36 = vsel %vm32, %v29, %v23
  %37 = vrot.lane.b32.xlu0 %v14, 126
  %v38 = vpop.permute.xlu0 %37
  %39 = vrot.lane.b32.xlu0 %v18, 126
  %v40 = vpop.permute.xlu0 %39
  %41 = vrot.lane.b32.xlu0 %v15, 126
  %v42 = vpop.permute.xlu0 %41
  %43 = vrot.lane.b32.xlu0 %v19, 126
  %v44 = vpop.permute.xlu0 %43
  %vm45 = vcmp.lt.s32.totalorder %v31, 126
  %v46 = vsel %vm45, %v42, %v44
  %v47 = vsel %vm45, %v40, %v42
  %v48 = vsel %vm45, %v38, %v40
  %v49 = vsel %vm45, %v44, %v38
  %50 = vrot.lane.b32.xlu0 %v14, 112
  %v51 = vpop.permute.xlu0 %50
  %52 = vrot.lane.b32.xlu0 %v18, 112
  %v53 = vpop.permute.xlu0 %52
  %54 = vrot.lane.b32.xlu0 %v15, 112
  %v55 = vpop.permute.xlu0 %54
  %56 = vrot.lane.b32.xlu0 %v19, 112
  %v57 = vpop.permute.xlu0 %56
  %vm58 = vcmp.lt.s32.totalorder %v31, 112
  %v59 = vsel %vm58, %v55, %v57
  %v60 = vsel %vm58, %v53, %v55
  %v61 = vsel %vm58, %v51, %v53
  %v62 = vsel %vm58, %v57, %v51
  %63 = vrot.lane.b32.xlu0 %v14, 111
  %v64 = vpop.permute.xlu0 %63
  %65 = vrot.lane.b32.xlu0 %v18, 111
  %v66 = vpop.permute.xlu0 %65
  %67 = vrot.lane.b32.xlu0 %v15, 111
  %v68 = vpop.permute.xlu0 %67
  %69 = vrot.lane.b32.xlu0 %v19, 111
  %v70 = vpop.permute.xlu0 %69
  %vm71 = vcmp.lt.s32.totalorder %v31, 111
  %v72 = vsel %vm71, %v68, %v70
  %v73 = vsel %vm71, %v66, %v68
  %v74 = vsel %vm71, %v64, %v66
  %v75 = vsel %vm71, %v70, %v64
  %76 = vrot.lane.b32.xlu0 %v14, 110
  %v77 = vpop.permute.xlu0 %76
  %78 = vrot.lane.b32.xlu0 %v18, 110
  %v79 = vpop.permute.xlu0 %78
  %80 = vrot.lane.b32.xlu0 %v15, 110
  %v81 = vpop.permute.xlu0 %80
  %82 = vrot.lane.b32.xlu0 %v19, 110
  %v83 = vpop.permute.xlu0 %82
  %vm84 = vcmp.lt.s32.totalorder %v31, 110
  %v85 = vsel %vm84, %v81, %v83
  %v86 = vsel %vm84, %v79, %v81
  %v87 = vsel %vm84, %v77, %v79
  %v88 = vsel %vm84, %v83, %v77
  %89 = vrot.lane.b32.xlu0 %v14, 96
  %v90 = vpop.permute.xlu0 %89
  %91 = vrot.lane.b32.xlu0 %v18, 96
  %v92 = vpop.permute.xlu0 %91
  %93 = vrot.lane.b32.xlu0 %v15, 96
  %v94 = vpop.permute.xlu0 %93
  %95 = vrot.lane.b32.xlu0 %v19, 96
  %v96 = vpop.permute.xlu0 %95
  %vm97 = vcmp.lt.s32.totalorder %v31, 96
  %v98 = vsel %vm97, %v94, %v96
  %v99 = vsel %vm97, %v92, %v94
  %v100 = vsel %vm97, %v90, %v92
  %v101 = vsel %vm97, %v96, %v90
  %102 = vrot.lane.b32.xlu0 %v14, 95
  %v103 = vpop.permute.xlu0 %102
  %104 = vrot.lane.b32.xlu0 %v18, 95
  %v105 = vpop.permute.xlu0 %104
  %106 = vrot.lane.b32.xlu0 %v15, 95
  %v107 = vpop.permute.xlu0 %106
  %108 = vrot.lane.b32.xlu0 %v19, 95
  %v109 = vpop.permute.xlu0 %108
  %vm110 = vcmp.lt.s32.totalorder %v31, 95
  %v111 = vsel %vm110, %v107, %v109
  %v112 = vsel %vm110, %v105, %v107
  %v113 = vsel %vm110, %v103, %v105
  %v114 = vsel %vm110, %v109, %v103
  %115 = vrot.lane.b32.xlu0 %v14, 94
  %v116 = vpop.permute.xlu0 %115
  %117 = vrot.lane.b32.xlu0 %v18, 94
  %v118 = vpop.permute.xlu0 %117
  %119 = vrot.lane.b32.xlu0 %v15, 94
  %v120 = vpop.permute.xlu0 %119
  %121 = vrot.lane.b32.xlu0 %v19, 94
  %v122 = vpop.permute.xlu0 %121
  %vm123 = vcmp.lt.s32.totalorder %v31, 94
  %v124 = vsel %vm123, %v120, %v122
  %v125 = vsel %vm123, %v118, %v120
  %v126 = vsel %vm123, %v116, %v118
  %v127 = vsel %vm123, %v122, %v116
  %v132 = vrot.slane %v35, 4
  %v133 = vrot.slane %v34, 4
  %v134 = vrot.slane %v33, 4
  %v135 = vrot.slane %v36, 4
  %v144 = vrot.slane %v61, 4
  %v145 = vrot.slane %v60, 4
  %v146 = vrot.slane %v59, 4
  %v147 = vrot.slane %v62, 4
  %v156 = vrot.slane %v87, 4
  %v157 = vrot.slane %v86, 4
  %v158 = vrot.slane %v85, 4
  %v159 = vrot.slane %v88, 4
  %v168 = vrot.slane %v113, 4
  %v169 = vrot.slane %v112, 4
  %v170 = vrot.slane %v111, 4
  %v171 = vrot.slane %v114, 4
  %vm176 = vcmask 1043456
  %v177 = vsel %vm176, %v14, %v132
  %v178 = vsel %vm176, %v18, %v133
  %v179 = vsel %vm176, %v15, %v134
  %v180 = vsel %vm176, %v19, %v135
  %v181 = vsel %vm176, %v48, %v144
  %v182 = vsel %vm176, %v47, %v145
  %v183 = vsel %vm176, %v46, %v146
  %v184 = vsel %vm176, %v49, %v147
  %v185 = vsel %vm176, %v74, %v156
  %v186 = vsel %vm176, %v73, %v157
  %v187 = vsel %vm176, %v72, %v158
  %v188 = vsel %vm176, %v75, %v159
  %v189 = vsel %vm176, %v100, %v168
  %v190 = vsel %vm176, %v99, %v169
  %v191 = vsel %vm176, %v98, %v170
  %v192 = vsel %vm176, %v101, %v171
  %v193 = vld [vmem:[%s1] sm:$0xff]
  %v194 = vld [vmem:[%s2] sm:$0xff]
  %196 = vset.pattern.permute.xlu0 0
  %197 = vperm.xlu0 %196, %v194
  %v198 = vpop.permute.xlu0 %197
  %vm200 = vcmask 293888
  %v202 = vsel %vm200, %v193, 0
  %v205 = vsel %vm176, %v126, 0
  %v208 = vsel %vm176, %v125, 0
  %v211 = vsel %vm176, %v124, 0
  %v214 = vsel %vm176, %v127, 0
  %216 = vmatprep.subr.mxu0 %v178
  %217 = vmatpush1.msra.mxu0 %v177
  %218 = vmatprep.subr.mxu0 %v182
  %219 = vmatpush1.msra.mxu0 %v181
  %220 = vmatprep.subr.mxu0 %v186
  %221 = vmatpush1.msra.mxu0 %v185
  %222 = vmatprep.subr.mxu0 %v190
  %223 = vmatpush1.msra.mxu0 %v189
  %224 = vmatprep.subr.mxu0 %v208
  %225 = vmatpush1.msra.mxu0 %v205
  %226 = vmatprep.subr.mxu0 0.0
  %227 = vmatpush1.msra.mxu0 0.0
  %228 = vmatprep.subr.mxu0 0.0
  %229 = vmatpush1.msra.mxu0 0.0
  %230 = vmatprep.subr.mxu0 0.0
  %231 = vmatpush1.msra.mxu0 0.0
  %232 = vmatprep.subr.mxu0 0.0
  %233 = vmatpush1.msra.mxu0 0.0
  %234 = vmatprep.subr.mxu0 0.0
  %235 = vmatpush1.msra.mxu0 0.0
  %236 = vmatprep.subr.mxu0 0.0
  %237 = vmatpush1.msra.mxu0 0.0
  %238 = vmatprep.subr.mxu0 0.0
  %239 = vmatpush1.msra.mxu0 0.0
  %240 = vmatprep.subr.mxu0 0.0
  %241 = vmatpush1.msra.mxu0 0.0
  %242 = vmatprep.subr.mxu0 0.0
  %243 = vmatpush1.msra.mxu0 0.0
  %244 = vmatprep.subr.mxu0 0.0
  %245 = vmatpush1.msra.mxu0 0.0
  %246 = vmatprep.subr.mxu0 0.0
  %247 = vmatpush1.msra.mxu0 0.0
  %248 = vmatprep.subr.mxu0 0.0
  %249 = vmatpush1.msra.mxu0 0.0
  %250 = vmatprep.subr.mxu0 0.0
  %251 = vmatpush1.msra.mxu0 0.0
  %252 = vmatprep.subr.mxu0 0.0
  %253 = vmatpush1.msra.mxu0 0.0
  %254 = vmatprep.subr.mxu0 0.0
  %255 = vmatpush1.msra.mxu0 0.0
  %256 = vmatprep.subr.mxu0 0.0
  %257 = vmatpush1.msra.mxu0 0.0
  %258 = vmatprep.subr.mxu0 0.0
  %259 = vmatpush1.msra.mxu0 0.0
  %260 = vmatprep.subr.mxu0 0.0
  %261 = vmatpush1.msra.mxu0 0.0
  %262 = vmatprep.subr.mxu0 0.0
  %263 = vmatpush1.msra.mxu0 0.0
  %264 = vmatprep.subr.mxu0 0.0
  %265 = vmatpush1.msra.mxu0 0.0
  %266 = vmatprep.subr.mxu0 0.0
  %267 = vmatpush1.msra.mxu0 0.0
  %268 = vmatprep.subr.mxu0 0.0
  %269 = vmatpush1.msra.mxu0 0.0
  %270 = vmatprep.subr.mxu0 0.0
  %271 = vmatpush1.msra.mxu0 0.0
  %272 = vmatprep.subr.mxu0 0.0
  %273 = vmatpush1.msra.mxu0 0.0
  %274 = vmatprep.subr.mxu0 0.0
  %275 = vmatpush1.msra.mxu0 0.0
  %276 = vmatprep.subr.mxu0 0.0
  %277 = vmatpush1.msra.mxu0 0.0
  %278 = vmatprep.subr.mxu0 0.0
  %279 = vmatpush1.msra.mxu0 0.0
  %280 = vmatprep.mubr.f32.mxu0 0.0
  %281 = vmatmul.mubr.f32.gmra.mrb[0].mxu0 %v202
  %v282 = vpop.f32.mrb[0].mxu0
  %v283 = vadd.f32 %v198, %v282
  %v284 = vpop.f32.mrb[0].mxu0
  %v285 = vadd.f32 %v198, %v284
  %286 = vdwg.mxu0
  %287 = vmatprep.subr.mxu0 %v180
  %288 = vmatpush1.msra.mxu0 %v179
  %289 = vmatprep.subr.mxu0 %v184
  %290 = vmatpush1.msra.mxu0 %v183
  %291 = vmatprep.subr.mxu0 %v188
  %292 = vmatpush1.msra.mxu0 %v187
  %293 = vmatprep.subr.mxu0 %v192
  %294 = vmatpush1.msra.mxu0 %v191
  %295 = vmatprep.subr.mxu0 %v214
  %296 = vmatpush1.msra.mxu0 %v211
  %297 = vmatprep.subr.mxu0 0.0
  %298 = vmatpush1.msra.mxu0 0.0
  %299 = vmatprep.subr.mxu0 0.0
  %300 = vmatpush1.msra.mxu0 0.0
  %301 = vmatprep.subr.mxu0 0.0
  %302 = vmatpush1.msra.mxu0 0.0
  %303 = vmatprep.subr.mxu0 0.0
  %304 = vmatpush1.msra.mxu0 0.0
  %305 = vmatprep.subr.mxu0 0.0
  %306 = vmatpush1.msra.mxu0 0.0
  %307 = vmatprep.subr.mxu0 0.0
  %308 = vmatpush1.msra.mxu0 0.0
  %309 = vmatprep.subr.mxu0 0.0
  %310 = vmatpush1.msra.mxu0 0.0
  %311 = vmatprep.subr.mxu0 0.0
  %312 = vmatpush1.msra.mxu0 0.0
  %313 = vmatprep.subr.mxu0 0.0
  %314 = vmatpush1.msra.mxu0 0.0
  %315 = vmatprep.subr.mxu0 0.0
  %316 = vmatpush1.msra.mxu0 0.0
  %317 = vmatprep.subr.mxu0 0.0
  %318 = vmatpush1.msra.mxu0 0.0
  %319 = vmatprep.subr.mxu0 0.0
  %320 = vmatpush1.msra.mxu0 0.0
  %321 = vmatprep.subr.mxu0 0.0
  %322 = vmatpush1.msra.mxu0 0.0
  %323 = vmatprep.subr.mxu0 0.0
  %324 = vmatpush1.msra.mxu0 0.0
  %325 = vmatprep.subr.mxu0 0.0
  %326 = vmatpush1.msra.mxu0 0.0
  %327 = vmatprep.subr.mxu0 0.0
  %328 = vmatpush1.msra.mxu0 0.0
  %329 = vmatprep.subr.mxu0 0.0
  %330 = vmatpush1.msra.mxu0 0.0
  %331 = vmatprep.subr.mxu0 0.0
  %332 = vmatpush1.msra.mxu0 0.0
  %333 = vmatprep.subr.mxu0 0.0
  %334 = vmatpush1.msra.mxu0 0.0
  %335 = vmatprep.subr.mxu0 0.0
  %336 = vmatpush1.msra.mxu0 0.0
  %337 = vmatprep.subr.mxu0 0.0
  %338 = vmatpush1.msra.mxu0 0.0
  %339 = vmatprep.subr.mxu0 0.0
  %340 = vmatpush1.msra.mxu0 0.0
  %341 = vmatprep.subr.mxu0 0.0
  %342 = vmatpush1.msra.mxu0 0.0
  %343 = vmatprep.subr.mxu0 0.0
  %344 = vmatpush1.msra.mxu0 0.0
  %345 = vmatprep.subr.mxu0 0.0
  %346 = vmatpush1.msra.mxu0 0.0
  %347 = vmatprep.subr.mxu0 0.0
  %348 = vmatpush1.msra.mxu0 0.0
  %349 = vmatprep.subr.mxu0 0.0
  %350 = vmatpush1.msra.mxu0 0.0
  %351 = vmatprep.mubr.f32.mxu0 0.0
  %352 = vmatmul.mubr.f32.gmra.mrb[0].mxu0 %v202
  %v353 = vpop.f32.mrb[0].mxu0
  %v354 = vadd.f32 %v198, %v353
  %v355 = vpop.f32.mrb[0].mxu0
  %v356 = vadd.f32 %v198, %v355
  %357 = vdwg.mxu0
  %v358 = vmax.f32 %v283, 0.0
  %v359 = vmax.f32 %v285, 0.0
  %v360 = vmax.f32 %v354, 0.0
  %v361 = vmax.f32 %v356, 0.0
  %362 = vst [vmem:[%s3] sm:$0xff] %v358
  %363 = vst [vmem:[%s3 + $0x8] sm:$0xff] %v359
  %364 = vst [vmem:[%s3 + $0x10] sm:$0xff] %v360
  %365 = vst [vmem:[%s3 + $0x18] sm:$0xff] %v361
  // Predicated region
  $region14: #{weighted_sum_forward.1} parent=0 // pred_check
    _
  $region15: #{weighted_sum_forward.1} parent=0 // pred_check_branch
    %367 = sbr.rel (0) target = $region17
  $region16: #{weighted_sum_forward.1} parent=0 // pred_region
    _
  $region17: #{weighted_sum_forward.1} parent=0 // pred_fallthru
    _
  // Predicated region
  $region18: #{weighted_sum_forward.1} parent=0 // pred_check
    _
  $region19: #{weighted_sum_forward.1} parent=0 // pred_check_branch
    %369 = sbr.rel (0) target = $region21
  $region20: #{weighted_sum_forward.1} parent=0 // pred_region
    _
  $region21: #{weighted_sum_forward.1} parent=0 // pred_fallthru
    _

</llo_original>
